<compile_context>
chip_gen: v7x
topology: tpu7x:2x2x1
jax: 0.10.0
libtpu: 0.0.40
codegen_flags: <defaults>
</compile_context>

<pallas_src>
import jax
import jax.numpy as jnp
from jax.experimental import pallas as pl
from jax.experimental.pallas import tpu as pltpu

OUT_W = 128  # lane-dense output slab width (4 real logit columns + zero pad)


def _aoe_kernel(x_ref, w1_ref, b1_ref, w2_ref, b2_ref, out_ref):
    x = x_ref[...]                                                   # [TM, H]
    # Fused first layer for both heads: [TM, 2H], f32 accumulation.
    h = jnp.dot(x, w1_ref[...], preferred_element_type=jnp.float32)
    h = jnp.maximum(h + b1_ref[...], 0.0)                            # bias + ReLU (f32)
    h = h.astype(w2_ref.dtype)                                       # bf16 operands for 2nd GEMM
    # Fused block-diagonal second layer into the lane-dense [TM, 128] slab.
    y = jnp.dot(h, w2_ref[...], preferred_element_type=jnp.float32)
    out_ref[...] = (y + b2_ref[...]).astype(out_ref.dtype)


def _aoe_kernel_stream(x_ref, w1_ref, b1_ref, w2_ref, b2_ref, out_ref, acc_ref):
    # Streams the fused hidden (2H) axis in chunks of tk; exact because bias
    # and ReLU act per-column of that axis and the 2nd GEMM contracts it.
    k = pl.program_id(1)

    @pl.when(k == 0)
    def _():
        acc_ref[...] = jnp.zeros_like(acc_ref)

    h = jnp.dot(x_ref[...], w1_ref[...], preferred_element_type=jnp.float32)
    h = jnp.maximum(h + b1_ref[...], 0.0)
    h = h.astype(w2_ref.dtype)
    acc_ref[...] += jnp.dot(h, w2_ref[...], preferred_element_type=jnp.float32)

    @pl.when(k == pl.num_programs(1) - 1)
    def _():
        out_ref[...] = (acc_ref[...] + b2_ref[...]).astype(out_ref.dtype)


def _round_up(x, m):
    return (x + m - 1) // m * m


def _pick_tk(h2, tk):
    """Largest multiple of 128 that divides the fused hidden dim and is <= tk."""
    c = min(tk, h2)
    c -= c % 128
    while c >= 128:
        if h2 % c == 0:
            return c
        c -= 128
    return h2


def aspect_opinion_extractor(x, params, *, tm=512, tk=512, use_bf16=True,
                             stream_k=None):
    """x: [B, S, H].  Returns (aspect_logits, opinion_logits), each [B, S, 2].

    tm:       token-tile rows per grid step (rounded to the row alignment).
    tk:       chunk width for the fused-hidden (2H) streaming path.
    use_bf16: bf16 MXU operands for BOTH GEMMs (f32 accumulation); ~1e-2 rel
              error vs f32 reference, recommended on all generations.
    stream_k: stream W1/W2 along the 2H axis (large H / v7x VMEM). None = auto
              (enabled when the fused W1 would exceed ~16 MiB resident).
    """
    B, S, H = x.shape
    M = B * S
    H2 = 2 * H
    final_dtype = x.dtype
    w_dtype = jnp.bfloat16 if use_bf16 else jnp.float32
    slab_dtype = jnp.bfloat16 if use_bf16 else x.dtype

    (w1a, b1a, w2a, b2a, w1o, b1o, w2o, b2o) = params

    # ---- pack fused parameters (traced, cheap, once per call) ----
    w1 = jnp.concatenate([w1a, w1o], axis=1).astype(w_dtype)        # [H, 2H]
    b1 = jnp.concatenate([b1a, b1o], axis=1).astype(jnp.float32)    # [1, 2H]
    w2 = jnp.zeros((H2, OUT_W), w_dtype)                            # block-diag, lane-padded
    w2 = w2.at[:H, 0:2].set(w2a.astype(w_dtype)).at[H:, 2:4].set(w2o.astype(w_dtype))
    b2 = jnp.zeros((1, OUT_W), jnp.float32)
    b2 = b2.at[:, 0:2].set(b2a).at[:, 2:4].set(b2o)

    x2d = x.reshape(M, H)
    if use_bf16:
        x2d = x2d.astype(jnp.bfloat16)

    x_isz = jnp.dtype(x2d.dtype).itemsize
    w_isz = jnp.dtype(w_dtype).itemsize
    o_isz = jnp.dtype(slab_dtype).itemsize

    if stream_k is None:
        stream_k = (H * H2 * w_isz) > (16 << 20)

    # ---- token tiling: >=2 grid steps when M allows (v7x megacore), no input pad ----
    row_align = 16 if use_bf16 else 8
    TM = max(row_align, _round_up(min(tm, pl.cdiv(M, 2)), row_align))
    grid_m = pl.cdiv(M, TM)

    # ---- VMEM budget: x/out double-buffered, resident weights single-buffered,
    #      plus the h intermediate (f32 + bf16 cast copy) ----
    if stream_k:
        tk_eff = _pick_tk(H2, tk)
        vmem_need = (2 * TM * H * x_isz                 # x tile (db)
                     + 2 * H * tk_eff * w_isz           # W1 chunk (db, streamed)
                     + 2 * 8 * tk_eff * 4               # b1 chunk (db, sublane-padded)
                     + 2 * tk_eff * OUT_W * w_isz       # W2 chunk (db, streamed)
                     + 8 * OUT_W * 4                    # b2 (single-buffered)
                     + 2 * TM * OUT_W * o_isz           # out tile (db)
                     + TM * OUT_W * 4                   # f32 accumulator scratch
                     + TM * tk_eff * (4 + w_isz))       # h chunk
    else:
        tk_eff = H2
        vmem_need = (2 * TM * H * x_isz                 # x tile (db)
                     + H * H2 * w_isz                   # fused W1 (single-buffered)
                     + 8 * H2 * 4                       # b1
                     + H2 * OUT_W * w_isz               # fused W2
                     + 8 * OUT_W * 4                    # b2
                     + 2 * TM * OUT_W * o_isz           # out tile (db)
                     + TM * H2 * (4 + w_isz))           # h intermediate
    vmem_limit = int(1.25 * vmem_need) + (2 << 20)
    vmem_limit = min(max(vmem_limit, 16 << 20), 48 << 20)

    cost = pl.CostEstimate(
        flops=2 * M * H * H2 + 2 * M * H2 * OUT_W,
        transcendentals=0,
        bytes_accessed=(M * H * x_isz + H * H2 * w_isz + H2 * OUT_W * w_isz
                        + H2 * 4 + OUT_W * 4 + M * OUT_W * o_isz),
    )

    if stream_k:
        grid = (grid_m, H2 // tk_eff)
        in_specs = [
            pl.BlockSpec((TM, H), lambda i, k: (i, 0)),            # x tile (resident over k)
            pl.BlockSpec((H, tk_eff), lambda i, k: (0, k)),        # W1 chunk (streamed)
            pl.BlockSpec((1, tk_eff), lambda i, k: (0, k)),        # b1 chunk
            pl.BlockSpec((tk_eff, OUT_W), lambda i, k: (k, 0)),    # W2 chunk (streamed)
            pl.BlockSpec((1, OUT_W), lambda i, k: (0, 0),
                         pipeline_mode=pl.Buffered(1)),            # b2 (resident)
        ]
        out_specs = pl.BlockSpec((TM, OUT_W), lambda i, k: (i, 0))
        scratch_shapes = [pltpu.VMEM((TM, OUT_W), jnp.float32)]
        kernel = _aoe_kernel_stream
        dim_sem = ("parallel", "arbitrary")
    else:
        grid = (grid_m,)
        in_specs = [
            pl.BlockSpec((TM, H), lambda i: (i, 0)),                        # x tile (pipelined)
            pl.BlockSpec((H, H2), lambda i: (0, 0),
                         pipeline_mode=pl.Buffered(1)),                     # fused W1 (resident)
            pl.BlockSpec((1, H2), lambda i: (0, 0),
                         pipeline_mode=pl.Buffered(1)),                     # fused b1
            pl.BlockSpec((H2, OUT_W), lambda i: (0, 0),
                         pipeline_mode=pl.Buffered(1)),                     # fused W2 (resident)
            pl.BlockSpec((1, OUT_W), lambda i: (0, 0),
                         pipeline_mode=pl.Buffered(1)),                     # fused b2
        ]
        out_specs = pl.BlockSpec((TM, OUT_W), lambda i: (i, 0))
        scratch_shapes = []
        kernel = _aoe_kernel
        dim_sem = ("parallel",)

    out = pl.pallas_call(
        kernel,
        out_shape=jax.ShapeDtypeStruct((M, OUT_W), slab_dtype),
        grid=grid,
        in_specs=in_specs,
        out_specs=out_specs,
        scratch_shapes=scratch_shapes,
        compiler_params=pltpu.CompilerParams(
            dimension_semantics=dim_sem,
            vmem_limit_bytes=vmem_limit),
        cost_estimate=cost,
    )(x2d, w1, b1, w2, b2)

    # Single lane slice of the slab, then split into the two heads (cheap).
    logits = out[:, :4].astype(final_dtype).reshape(B, S, 4)
    return logits[..., 0:2], logits[..., 2:4]


def init_params(key, hidden_size):
    """Deterministic synthetic params; weights stored as (in, out)."""
    ks = jax.random.split(key, 8)
    scale1 = 1.0 / jnp.sqrt(hidden_size)
    w1a = jax.random.uniform(ks[0], (hidden_size, hidden_size), jnp.float32, -scale1, scale1)
    b1a = jax.random.uniform(ks[1], (1, hidden_size), jnp.float32, -scale1, scale1)
    w2a = jax.random.uniform(ks[2], (hidden_size, 2), jnp.float32, -scale1, scale1)
    b2a = jax.random.uniform(ks[3], (1, 2), jnp.float32, -scale1, scale1)
    w1o = jax.random.uniform(ks[4], (hidden_size, hidden_size), jnp.float32, -scale1, scale1)
    b1o = jax.random.uniform(ks[5], (1, hidden_size), jnp.float32, -scale1, scale1)
    w2o = jax.random.uniform(ks[6], (hidden_size, 2), jnp.float32, -scale1, scale1)
    b2o = jax.random.uniform(ks[7], (1, 2), jnp.float32, -scale1, scale1)
    return (w1a, b1a, w2a, b2a, w1o, b1o, w2o, b2o)


if __name__ == "__main__":
    key = jax.random.PRNGKey(0)
    kx, kp, kx2, kp2 = jax.random.split(key, 4)

    # ---- small canonical shape (B=2, S=8, H=32) ----
    B, S, H = 2, 8, 32
    x = jax.random.normal(kx, (B, S, H), jnp.float32)
    params = init_params(kp, H)
    w1a, b1a, w2a, b2a, w1o, b1o, w2o, b2o = params
    ref_a = jnp.maximum(x @ w1a + b1a[0], 0.0) @ w2a + b2a[0]
    ref_o = jnp.maximum(x @ w1o + b1o[0], 0.0) @ w2o + b2o[0]

    # Default path: bf16 MXU operands (f32 accumulation), resident fused weights.
    asp, opn = aspect_opinion_extractor(x, params)
    jax.block_until_ready((asp, opn))
    assert asp.shape == (B, S, 2) and opn.shape == (B, S, 2)
    assert jnp.allclose(asp, ref_a, rtol=5e-2, atol=5e-2), "aspect head mismatch (bf16)"
    assert jnp.allclose(opn, ref_o, rtol=5e-2, atol=5e-2), "opinion head mismatch (bf16)"

    # Exact f32 path.
    asp32, opn32 = aspect_opinion_extractor(x, params, use_bf16=False)
    jax.block_until_ready((asp32, opn32))
    assert jnp.allclose(asp32, ref_a, rtol=1e-4, atol=1e-4), "aspect head mismatch (f32)"
    assert jnp.allclose(opn32, ref_o, rtol=1e-4, atol=1e-4), "opinion head mismatch (f32)"

    # K-streaming path (used automatically for very large H on v7x); force it
    # at a small shape (2H = 256 split into two 128-wide chunks) to validate.
    B2, S2, H2 = 2, 16, 128
    x2 = jax.random.normal(kx2, (B2, S2, H2), jnp.float32)
    params2 = init_params(kp2, H2)
    w1a2, b1a2, w2a2, b2a2, w1o2, b1o2, w2o2, b2o2 = params2
    ref_a2 = jnp.maximum(x2 @ w1a2 + b1a2[0], 0.0) @ w2a2 + b2a2[0]
    ref_o2 = jnp.maximum(x2 @ w1o2 + b1o2[0], 0.0) @ w2o2 + b2o2[0]
    asp_s, opn_s = aspect_opinion_extractor(x2, params2, use_bf16=False,
                                            stream_k=True, tk=128)
    jax.block_until_ready((asp_s, opn_s))
    assert jnp.allclose(asp_s, ref_a2, rtol=5e-4, atol=5e-4), "aspect head mismatch (stream-K)"
    assert jnp.allclose(opn_s, ref_o2, rtol=5e-4, atol=5e-4), "opinion head mismatch (stream-K)"

    print("KERNEL_OK")
</pallas_src>

<mosaic_0001>
module attributes {stable_mosaic.version = 11 : i64} {
  func.func @_aoe_kernel(%arg0: i32, %arg1: memref<16x32xbf16, #tpu.memory_space<vmem>>, %arg2: memref<32x64xbf16, #tpu.memory_space<vmem>>, %arg3: memref<1x64xf32, #tpu.memory_space<vmem>>, %arg4: memref<64x128xbf16, #tpu.memory_space<vmem>>, %arg5: memref<1x128xf32, #tpu.memory_space<vmem>>, %arg6: memref<16x128xbf16, #tpu.memory_space<vmem>>) attributes {dimension_semantics = [#tpu.dimension_semantics<parallel>], iteration_bounds = array<i64: 1>, scalar_prefetch = 0 : i64, scratch_operands = 0 : i64, tpu.core_type = #tpu.core_type<tc>, window_params = [{transform_indices = @transform_0, window_bounds = array<i64: 16, 32>}, {pipeline_mode = #tpu.pipeline_mode<synchronous>, transform_indices = @transform_1, window_bounds = array<i64: 32, 64>}, {pipeline_mode = #tpu.pipeline_mode<synchronous>, transform_indices = @transform_2, window_bounds = array<i64: 1, 64>}, {pipeline_mode = #tpu.pipeline_mode<synchronous>, transform_indices = @transform_3, window_bounds = array<i64: 64, 128>}, {pipeline_mode = #tpu.pipeline_mode<synchronous>, transform_indices = @transform_4, window_bounds = array<i64: 1, 128>}, {transform_indices = @transform_5, window_bounds = array<i64: 16, 128>}]} {
    %c0 = arith.constant 0 : index
    %c0_0 = arith.constant 0 : index
    %0 = vector.load %arg1[%c0, %c0_0] : memref<16x32xbf16, #tpu.memory_space<vmem>>, vector<16x32xbf16>
    %c0_1 = arith.constant 0 : index
    %c0_2 = arith.constant 0 : index
    %1 = vector.load %arg2[%c0_1, %c0_2] : memref<32x64xbf16, #tpu.memory_space<vmem>>, vector<32x64xbf16>
    %cst = arith.constant dense<0.000000e+00> : vector<16x64xf32>
    %2 = tpu.matmul %0, %1, %cst {dimension_numbers = #tpu.dot_dimension_numbers<[1], [0], [0], [1], [0, 0, 1, 1], [], []>} : vector<16x32xbf16>, vector<32x64xbf16>, vector<16x64xf32> -> vector<16x64xf32>
    %c0_3 = arith.constant 0 : index
    %c0_4 = arith.constant 0 : index
    %3 = vector.load %arg3[%c0_3, %c0_4] : memref<1x64xf32, #tpu.memory_space<vmem>>, vector<1x64xf32>
    %4 = vector.broadcast %3 : vector<1x64xf32> to vector<16x64xf32>
    %5 = arith.addf %2, %4 : vector<16x64xf32>
    %cst_5 = arith.constant 0.000000e+00 : f32
    %6 = vector.broadcast %cst_5 : f32 to vector<16x64xf32>
    %7 = arith.maximumf %5, %6 : vector<16x64xf32>
    %8 = arith.truncf %7 : vector<16x64xf32> to vector<16x64xbf16>
    %c0_6 = arith.constant 0 : index
    %c0_7 = arith.constant 0 : index
    %9 = vector.load %arg4[%c0_6, %c0_7] : memref<64x128xbf16, #tpu.memory_space<vmem>>, vector<64x128xbf16>
    %cst_8 = arith.constant dense<0.000000e+00> : vector<16x128xf32>
    %10 = tpu.matmul %8, %9, %cst_8 {dimension_numbers = #tpu.dot_dimension_numbers<[1], [0], [0], [1], [0, 0, 1, 1], [], []>} : vector<16x64xbf16>, vector<64x128xbf16>, vector<16x128xf32> -> vector<16x128xf32>
    %c0_9 = arith.constant 0 : index
    %c0_10 = arith.constant 0 : index
    %11 = vector.load %arg5[%c0_9, %c0_10] : memref<1x128xf32, #tpu.memory_space<vmem>>, vector<1x128xf32>
    %12 = vector.broadcast %11 : vector<1x128xf32> to vector<16x128xf32>
    %13 = arith.addf %10, %12 : vector<16x128xf32>
    %14 = arith.truncf %13 : vector<16x128xf32> to vector<16x128xbf16>
    %c0_11 = arith.constant 0 : index
    %c0_12 = arith.constant 0 : index
    %15 = vector.load %arg6[%c0_11, %c0_12] : memref<16x128xbf16, #tpu.memory_space<vmem>>, vector<16x128xbf16>
    tpu.vector_store %arg6[%c0_11, %c0_12], %14 {strides = array<i32>} : memref<16x128xbf16, #tpu.memory_space<vmem>>, vector<16x128xbf16>,
    return
  }
  func.func @transform_0(%arg0: i32) -> (i32, i32) {
    %c0_i32 = arith.constant 0 : i32
    %c0_i32_0 = arith.constant 0 : i32
    return %arg0, %c0_i32 : i32, i32
  }
  func.func @transform_1(%arg0: i32) -> (i32, i32) {
    %c0_i32 = arith.constant 0 : i32
    %c0_i32_0 = arith.constant 0 : i32
    %c0_i32_1 = arith.constant 0 : i32
    return %c0_i32, %c0_i32_0 : i32, i32
  }
  func.func @transform_2(%arg0: i32) -> (i32, i32) {
    %c0_i32 = arith.constant 0 : i32
    %c0_i32_0 = arith.constant 0 : i32
    %c0_i32_1 = arith.constant 0 : i32
    return %c0_i32, %c0_i32_0 : i32, i32
  }
  func.func @transform_3(%arg0: i32) -> (i32, i32) {
    %c0_i32 = arith.constant 0 : i32
    %c0_i32_0 = arith.constant 0 : i32
    %c0_i32_1 = arith.constant 0 : i32
    return %c0_i32, %c0_i32_0 : i32, i32
  }
  func.func @transform_4(%arg0: i32) -> (i32, i32) {
    %c0_i32 = arith.constant 0 : i32
    %c0_i32_0 = arith.constant 0 : i32
    %c0_i32_1 = arith.constant 0 : i32
    return %c0_i32, %c0_i32_0 : i32, i32
  }
  func.func @transform_5(%arg0: i32) -> (i32, i32) {
    %c0_i32 = arith.constant 0 : i32
    %c0_i32_0 = arith.constant 0 : i32
    return %arg0, %c0_i32 : i32, i32
  }
}

</mosaic_0001>

<llo_original>
// kernel: tpu_custom_call.1
$region0: #{tpu_custom_call.1}
  #allocation0 [shape = 'u32[]', space=smem, size = 0x4, offset = 0x4, fixed_abs, tag = 'smem constant byte address 0x4 - core index']
  #allocation1 [shape = 'u32[144,128]{1,0:T(1,128)}', space=vmem, size = 0x12000, scoped, tag = 'internal scratch']
  %s0 = inlined_call_operand.hbm [shape: bf16[16,32], index: 0, kind: input, shape index: {}]
  %s1 = inlined_call_operand.hbm [shape: bf16[32,64], index: 1, kind: input, shape index: {}]
  %s2 = inlined_call_operand.vmem [shape: f32[1,64], index: 2, kind: input, shape index: {}]
  %s3 = inlined_call_operand.hbm [shape: bf16[64,128], index: 3, kind: input, shape index: {}]
  %s4 = inlined_call_operand.vmem [shape: f32[1,128], index: 4, kind: input, shape index: {}]
  %s5 = inlined_call_operand.hbm [shape: bf16[16,128], index: 5, kind: output, shape index: {}]
  %s6 = sld [smem:[#allocation0]]
  $region42: #{tpu_custom_call.1} parent=0
    _
  %s8 = ssub.s32 1, %s6
  %s9 = scalar_select 0, %s8, %s6
  $region1: #{tpu_custom_call.1} parent=0
    #allocation2 [shape = 'u8[4096]{0}', space=vmem, size = 0x1000, scoped, tag = 'input window, operand 0, single buffered']
    #allocation3 [shape = 's32[1]{0}', space=sflag, size = 0x4, scoped, tag = 'scoped memory for tpu_custom_call.1']
    #allocation4 [shape = 's32[1]{0}', space=sflag, size = 0x4, scoped, tag = 'scoped memory for tpu_custom_call.1']
    #allocation5 [shape = 'u8[8192]{0}', space=vmem, size = 0x2000, scoped, tag = 'input window, operand 1, single buffered']
    #allocation6 [shape = 's32[1]{0}', space=sflag, size = 0x4, scoped, tag = 'scoped memory for tpu_custom_call.1']
    #allocation7 [shape = 'u8[16384]{0}', space=vmem, size = 0x4000, scoped, tag = 'input window, operand 3, single buffered']
    #allocation8 [shape = 'u8[4096]{0}', space=vmem, size = 0x1000, scoped, tag = 'output window, operand 0, single buffered']
    %10 = vsyncpa [#allocation3], 0
    %11 = vsyncpa [#allocation6], 0
    %12 = vsyncpa [#allocation4], 0
    // Predicated region
    $region2: #{tpu_custom_call.1} parent=1 // pred_check
      _
    $region3: #{tpu_custom_call.1} parent=1 // pred_check_branch
      %14 = sbr.rel (0) target = $region5
    $region4: #{tpu_custom_call.1} parent=1 // pred_region
      %s16 = ssub.s32 128, 128
      %17 = vsyncadd [#allocation3], %s16
      %s18 = sshll.u32 [#allocation2], 4
      %s19 = int_to_ptr.vmem [resolvable:$true] %s18
      %24 = dma.hbm_to_vmem [thread:$0]  %s0, 128, %s19, [#allocation3], 64, 64, 4
    $region5: #{tpu_custom_call.1} parent=1 // pred_fallthru
      _
    // Predicated region
    $region6: #{tpu_custom_call.1} parent=1 // pred_check
      _
    $region7: #{tpu_custom_call.1} parent=1 // pred_check_branch
      %26 = sbr.rel (0) target = $region9
    $region8: #{tpu_custom_call.1} parent=1 // pred_region
      %s28 = ssub.s32 256, 256
      %29 = vsyncadd [#allocation6], %s28
      %s30 = sshll.u32 [#allocation5], 4
      %s31 = int_to_ptr.vmem [resolvable:$true] %s30
      %36 = dma.hbm_to_vmem [thread:$0]  %s1, 256, %s31, [#allocation6], 64, 64, 4
    $region9: #{tpu_custom_call.1} parent=1 // pred_fallthru
      _
    // Predicated region
    $region10: #{tpu_custom_call.1} parent=1 // pred_check
      _
    $region11: #{tpu_custom_call.1} parent=1 // pred_check_branch
      %38 = sbr.rel (0) target = $region13
    $region12: #{tpu_custom_call.1} parent=1 // pred_region
      _
    $region13: #{tpu_custom_call.1} parent=1 // pred_fallthru
      _
    // Predicated region
    $region14: #{tpu_custom_call.1} parent=1 // pred_check
      _
    $region15: #{tpu_custom_call.1} parent=1 // pred_check_branch
      %40 = sbr.rel (0) target = $region17
    $region16: #{tpu_custom_call.1} parent=1 // pred_region
      %s42 = ssub.s32 512, 512
      %43 = vsyncadd [#allocation6], %s42
      %s44 = sshll.u32 [#allocation7], 4
      %s45 = int_to_ptr.vmem [resolvable:$true] %s44
      %50 = dma.hbm_to_vmem [thread:$0]  %s3, 512, %s45, [#allocation6], 64, 64, 4
    $region17: #{tpu_custom_call.1} parent=1 // pred_fallthru
      _
    // Predicated region
    $region18: #{tpu_custom_call.1} parent=1 // pred_check
      _
    $region19: #{tpu_custom_call.1} parent=1 // pred_check_branch
      %52 = sbr.rel (0) target = $region21
    $region20: #{tpu_custom_call.1} parent=1 // pred_region
      _
    $region21: #{tpu_custom_call.1} parent=1 // pred_fallthru
      _
    // Predicated region
    $region22: #{tpu_custom_call.1} parent=1 // pred_check
      _
    $region23: #{tpu_custom_call.1} parent=1 // pred_check_branch
      %54 = sbr.rel (0) target = $region25
    $region24: #{tpu_custom_call.1} parent=1 // pred_region
      %55 = dma.done [#allocation3], 128
    $region25: #{tpu_custom_call.1} parent=1 // pred_fallthru
      _
    // Predicated region
    $region26: #{tpu_custom_call.1} parent=1 // pred_check
      _
    $region27: #{tpu_custom_call.1} parent=1 // pred_check_branch
      %57 = sbr.rel (0) target = $region29
    $region28: #{tpu_custom_call.1} parent=1 // pred_region
      %58 = dma.done [#allocation6], 256
    $region29: #{tpu_custom_call.1} parent=1 // pred_fallthru
      _
    // Predicated region
    $region30: #{tpu_custom_call.1} parent=1 // pred_check
      _
    $region31: #{tpu_custom_call.1} parent=1 // pred_check_branch
      %60 = sbr.rel (0) target = $region33
    $region32: #{tpu_custom_call.1} parent=1 // pred_region
      %61 = dma.done [#allocation6], 512
    $region33: #{tpu_custom_call.1} parent=1 // pred_fallthru
      _
    %v63 = vld [vmem:[#allocation2] sm:$0xf]
    %v64 = vld [vmem:[#allocation2 + $0x4] sm:$0xf]
    %v65 = vld [vmem:[#allocation5] sm:$0xf]
    %v66 = vld [vmem:[#allocation5 + $0x4] sm:$0xf]
    %v67 = vld [vmem:[#allocation5 + $0x8] sm:$0xf]
    %v68 = vld [vmem:[#allocation5 + $0xc] sm:$0xf]
    %v69 = vld [vmem:[%s2] sm:$0x1]
    %v71 = vlaneseq
    %v72 = vshrl.u32 %v71, 7
    %v73 = vsub.s32 0, %v72
    %v74 = vrot.slane %v69, %v73
    %v78 = vunpack.c.l.b16 %v63
    %v79 = vunpack.c.l.b16 %v64
    %v80 = vpack.c.b16 %v79, %v78
    %v85 = vunpack.c.l.b16 %v65
    %v86 = vunpack.c.l.b16 %v66
    %v87 = vunpack.c.l.b16 %v67
    %v88 = vunpack.c.l.b16 %v68
    %v89 = vpack.c.b16 %v86, %v85
    %v90 = vpack.c.b16 %v88, %v87
    %vm93 = vcmask 261120
    %v95 = vsel %vm93, %v80, 0
    %97 = vmatprep.subr.bf16.mxu0 0
    %98 = vmatpush1.bf16.msra.mxu0 %v89
    %99 = vmatprep.subr.bf16.mxu0 0
    %100 = vmatpush1.bf16.msra.mxu0 %v90
    %101 = vmatprep.subr.bf16.mxu0 0
    %102 = vmatpush1.bf16.msra.mxu0 0
    %103 = vmatprep.subr.bf16.mxu0 0
    %104 = vmatpush1.bf16.msra.mxu0 0
    %105 = vmatprep.subr.bf16.mxu0 0
    %106 = vmatpush1.bf16.msra.mxu0 0
    %107 = vmatprep.subr.bf16.mxu0 0
    %108 = vmatpush1.bf16.msra.mxu0 0
    %109 = vmatprep.subr.bf16.mxu0 0
    %110 = vmatpush1.bf16.msra.mxu0 0
    %111 = vmatprep.subr.bf16.mxu0 0
    %112 = vmatpush1.bf16.msra.mxu0 0
    %113 = vmatprep.subr.bf16.mxu0 0
    %114 = vmatpush1.bf16.msra.mxu0 0
    %115 = vmatprep.subr.bf16.mxu0 0
    %116 = vmatpush1.bf16.msra.mxu0 0
    %117 = vmatprep.subr.bf16.mxu0 0
    %118 = vmatpush1.bf16.msra.mxu0 0
    %119 = vmatprep.subr.bf16.mxu0 0
    %120 = vmatpush1.bf16.msra.mxu0 0
    %121 = vmatprep.subr.bf16.mxu0 0
    %122 = vmatpush1.bf16.msra.mxu0 0
    %123 = vmatprep.subr.bf16.mxu0 0
    %124 = vmatpush1.bf16.msra.mxu0 0
    %125 = vmatprep.subr.bf16.mxu0 0
    %126 = vmatpush1.bf16.msra.mxu0 0
    %127 = vmatprep.subr.bf16.mxu0 0
    %128 = vmatpush1.bf16.msra.mxu0 0
    %129 = vmatprep.mubr.bf16.mxu0 0
    %130 = vmatmul.mubr.bf16.gmra.mrb[0].mxu0 %v95
    %v131 = vpop.f32.mrb[0].mxu0
    %v132 = vadd.f32 %v74, %v131
    %v133 = vpop.f32.mrb[0].mxu0
    %v134 = vpop.f32.mrb[0].mxu0
    %v135 = vadd.f32 %v74, %v134
    %v136 = vpop.f32.mrb[0].mxu0
    %137 = vdwg.mxu0
    %v138 = vmax.f32 %v132, 0.0
    %v139 = vmax.f32 %v135, 0.0
    %v140 = vpack.c.bf16 %v139, %v138
    %v141 = vld [vmem:[#allocation7] sm:$0xf]
    %v142 = vld [vmem:[#allocation7 + $0x4] sm:$0xf]
    %v143 = vld [vmem:[#allocation7 + $0x8] sm:$0xf]
    %v144 = vld [vmem:[#allocation7 + $0xc] sm:$0xf]
    %v145 = vld [vmem:[#allocation7 + $0x10] sm:$0xf]
    %v146 = vld [vmem:[#allocation7 + $0x14] sm:$0xf]
    %v147 = vld [vmem:[#allocation7 + $0x18] sm:$0xf]
    %v148 = vld [vmem:[#allocation7 + $0x1c] sm:$0xf]
    %v149 = vld [vmem:[%s4] sm:$0x1]
    %v151 = vlaneseq
    %v152 = vshrl.u32 %v151, 7
    %v153 = vsub.s32 0, %v152
    %v154 = vrot.slane %v149, %v153
    %v164 = vunpack.c.l.b16 %v141
    %v165 = vunpack.c.l.b16 %v142
    %v166 = vunpack.c.l.b16 %v143
    %v167 = vunpack.c.l.b16 %v144
    %v168 = vunpack.c.l.b16 %v145
    %v169 = vunpack.c.l.b16 %v146
    %v170 = vunpack.c.l.b16 %v147
    %v171 = vunpack.c.l.b16 %v148
    %v172 = vpack.c.b16 %v165, %v164
    %v173 = vpack.c.b16 %v167, %v166
    %v174 = vpack.c.b16 %v169, %v168
    %v175 = vpack.c.b16 %v171, %v170
    %vm180 = vcmask 523264
    %v182 = vsel %vm180, %v140, 0
    %184 = vmatprep.subr.bf16.mxu0 0
    %185 = vmatpush1.bf16.msra.mxu0 %v172
    %186 = vmatprep.subr.bf16.mxu0 0
    %187 = vmatpush1.bf16.msra.mxu0 %v173
    %188 = vmatprep.subr.bf16.mxu0 0
    %189 = vmatpush1.bf16.msra.mxu0 %v174
    %190 = vmatprep.subr.bf16.mxu0 0
    %191 = vmatpush1.bf16.msra.mxu0 %v175
    %192 = vmatprep.subr.bf16.mxu0 0
    %193 = vmatpush1.bf16.msra.mxu0 0
    %194 = vmatprep.subr.bf16.mxu0 0
    %195 = vmatpush1.bf16.msra.mxu0 0
    %196 = vmatprep.subr.bf16.mxu0 0
    %197 = vmatpush1.bf16.msra.mxu0 0
    %198 = vmatprep.subr.bf16.mxu0 0
    %199 = vmatpush1.bf16.msra.mxu0 0
    %200 = vmatprep.subr.bf16.mxu0 0
    %201 = vmatpush1.bf16.msra.mxu0 0
    %202 = vmatprep.subr.bf16.mxu0 0
    %203 = vmatpush1.bf16.msra.mxu0 0
    %204 = vmatprep.subr.bf16.mxu0 0
    %205 = vmatpush1.bf16.msra.mxu0 0
    %206 = vmatprep.subr.bf16.mxu0 0
    %207 = vmatpush1.bf16.msra.mxu0 0
    %208 = vmatprep.subr.bf16.mxu0 0
    %209 = vmatpush1.bf16.msra.mxu0 0
    %210 = vmatprep.subr.bf16.mxu0 0
    %211 = vmatpush1.bf16.msra.mxu0 0
    %212 = vmatprep.subr.bf16.mxu0 0
    %213 = vmatpush1.bf16.msra.mxu0 0
    %214 = vmatprep.subr.bf16.mxu0 0
    %215 = vmatpush1.bf16.msra.mxu0 0
    %216 = vmatprep.mubr.bf16.mxu0 0
    %217 = vmatmul.mubr.bf16.gmra.mrb[0].mxu0 %v182
    %v218 = vpop.f32.mrb[0].mxu0
    %v219 = vadd.f32 %v154, %v218
    %v220 = vpop.f32.mrb[0].mxu0
    %v221 = vpop.f32.mrb[0].mxu0
    %v222 = vadd.f32 %v154, %v221
    %v223 = vpop.f32.mrb[0].mxu0
    %224 = vdwg.mxu0
    %v225 = vpack.c.bf16 %v222, %v219
    %v227 = vunpack.c.l.b16 %v225
    %v228 = vunpack.c.h.b16 %v225
    %v229 = vpack.c.b16 %v227, %v227
    %v230 = vpack.c.b16 %v228, %v228
    %233 = vst [vmem:[#allocation8] sm:$0xf] %v229
    %234 = vst [vmem:[#allocation8 + $0x4] sm:$0xf] %v230
    // Predicated region
    $region34: #{tpu_custom_call.1} parent=1 // pred_check
      _
    $region35: #{tpu_custom_call.1} parent=1 // pred_check_branch
      %236 = sbr.rel (0) target = $region37
    $region36: #{tpu_custom_call.1} parent=1 // pred_region
      %s238 = ssub.s32 128, 128
      %239 = vsyncadd [#allocation4], %s238
      %s240 = sshll.u32 [#allocation8], 4
      %s241 = int_to_ptr.vmem [resolvable:$true] %s240
      %246 = dma.vmem_to_hbm [thread:$0]  %s241, 128, %s5, [#allocation4], 64, 64, 4
    $region37: #{tpu_custom_call.1} parent=1 // pred_fallthru
      _
    // Predicated region
    $region38: #{tpu_custom_call.1} parent=1 // pred_check
      _
    $region39: #{tpu_custom_call.1} parent=1 // pred_check_branch
      %248 = sbr.rel (0) target = $region41
    $region40: #{tpu_custom_call.1} parent=1 // pred_region
      %249 = dma.done [#allocation4], 128
    $region41: #{tpu_custom_call.1} parent=1 // pred_fallthru
      _
    %250 = vsyncpa [#allocation3], 1
    %251 = vsyncpa [#allocation6], 1
    %252 = vsyncpa [#allocation4], 1

</llo_original>
